<compile_context>
chip_gen: v7x
topology: tpu7x:2x2x1
jax: 0.10.0
libtpu: 0.0.40
codegen_flags: <defaults>
</compile_context>

<pallas_src>
import math
import jax
import jax.numpy as jnp
from jax.experimental import pallas as pl
from jax.experimental.pallas import tpu as pltpu

_LANE = 128
_NEG_LARGE = jnp.float32(-1e30)  # masks padded topic columns out of the softmax


def _round_up(x, m):
    return ((x + m - 1) // m) * m


def _sublane(dtype):
    # Minimum second-to-last tile granularity: f32 -> 8, bf16 -> 16, int8/fp8 -> 32.
    return max(8, 32 // jnp.dtype(dtype).itemsize)


# --------------------------------------------------------------------------- kernel
def topic_predictor_kernel(x_ref, w_ref, b_ref, out_ref):
    """One batch tile of documents.

    x_ref:   (B_TILE, S*D)   flattened sentence vectors (storage dtype, no upcast)
    w_ref:   (S*D, T_PAD)    fused (mean + Linear) weight, resident across the grid
    b_ref:   (1, T_PAD)      f32 bias; padded columns hold -1e30 so exp() -> 0
    out_ref: (B_TILE, T_PAD) f32 softmax topic distribution (padded columns come out 0)
    """
    # Doc_extractor('mean') + nn.Linear fused into one MXU contraction (K = S*D),
    # accumulating in f32.
    logits = jnp.dot(x_ref[...], w_ref[...],
                     preferred_element_type=jnp.float32) + b_ref[...]

    # F.softmax(label, dim=1) — numerically stable; padded topic columns give exp() == 0
    # so they perturb neither the max nor the denominator.
    m = jnp.max(logits, axis=1, keepdims=True)
    e = jnp.exp(logits - m)
    denom = jnp.sum(e, axis=1, keepdims=True)
    out_ref[...] = (e * pl.reciprocal(denom)).astype(out_ref.dtype)  # exact 1/x


# --------------------------------------------------------------------------- params (one-time)
def prepare_params(weight, bias, n_sents, x_dtype=jnp.float32):
    """Hoist the mean-fusion / transpose / padding out of the per-call path.

    weight: (T, D) torch nn.Linear layout; bias: (T,); n_sents: S (sentence count).
    Returns:
      w_fused: (S*D, T_PAD) in x_dtype, equal to tile(W.T / S, S) with zero-padded topic
               columns, so that  x.reshape(B, S*D) @ w_fused == mean(x, 1) @ W.T .
      b_pad:   (1, T_PAD) f32; padded columns = -1e30 (vanish from the softmax).
    """
    t, d = weight.shape
    t_pad = _round_up(max(t, 1), _LANE)
    w_scaled = weight.T.astype(jnp.float32) / jnp.float32(n_sents)          # (D, T)
    w_tiled = jnp.tile(w_scaled, (n_sents, 1)).astype(x_dtype)              # (S*D, T)
    w_fused = jnp.zeros((n_sents * d, t_pad), dtype=x_dtype).at[:, :t].set(w_tiled)
    b_pad = jnp.full((1, t_pad), _NEG_LARGE, dtype=jnp.float32)
    b_pad = b_pad.at[0, :t].set(bias.astype(jnp.float32))
    return w_fused, b_pad


# --------------------------------------------------------------------------- wrapper
def topic_predictor(sents_vec, w_fused, b_pad, topic_num):
    """sents_vec: (B, S, D); w_fused: (S*D, T_PAD); b_pad: (1, T_PAD). Returns (B, topic_num) f32."""
    B, S, D = sents_vec.shape
    sd = S * D
    assert w_fused.shape[0] == sd
    t_pad = w_fused.shape[1]

    x2d = sents_vec.reshape(B, sd)  # contiguous reshape: layout bitcast, no HBM copy

    x_item = jnp.dtype(sents_vec.dtype).itemsize
    w_item = jnp.dtype(w_fused.dtype).itemsize
    out_item = 4  # f32 output (matches PyTorch semantics)

    # Per-generation VMEM capacity (v5e/v6e: 128 MiB, v7x: 64 MiB per TensorCore).
    try:
        vmem_cap = int(pltpu.get_tpu_info().vmem_capacity_bytes)
    except Exception:
        vmem_cap = 64 << 20  # conservative (v7x-safe) fallback
    budget = int(vmem_cap * 0.6)

    # Accurate VMEM accounting (single 2x for double buffering, residents + out included):
    #   resident W/bias (constant index_map -> fetched once) + double-buffered x and out tiles.
    fixed = 2 * sd * t_pad * w_item + 2 * t_pad * 4
    per_row = 2 * (sd * x_item + t_pad * out_item)
    headroom = 2 << 20
    sub = _sublane(sents_vec.dtype)
    b_tile = max(sub, ((budget - fixed - headroom) // per_row) // sub * sub)

    if b_tile >= B:
        # Whole batch fits in one tile: a block equal to the full array dims is always legal,
        # so no padding and no ragged block at all.
        b_tile = B
        grid = 1
    else:
        # Ragged last block (pl.cdiv): avoids the jnp.pad full-array HBM rewrite. Garbage rows
        # in the tail x tile only affect output rows that are never written back to HBM.
        grid = pl.cdiv(B, b_tile)

    vmem_limit = min(max(fixed + per_row * b_tile + (4 << 20), 32 << 20),
                     int(vmem_cap * 0.9))

    cost = pl.CostEstimate(
        flops=2 * B * sd * t_pad,
        transcendentals=B * t_pad,
        bytes_accessed=(B * sd * x_item + sd * t_pad * w_item
                        + t_pad * 4 + B * t_pad * out_item),
    )

    out_padded = pl.pallas_call(
        topic_predictor_kernel,
        out_shape=jax.ShapeDtypeStruct((B, t_pad), jnp.float32),
        grid_spec=pl.GridSpec(
            grid=(grid,),
            in_specs=[
                pl.BlockSpec((b_tile, sd), lambda i: (i, 0)),   # streamed x tile (lane-dense K)
                pl.BlockSpec((sd, t_pad), lambda i: (0, 0)),    # resident fused weight
                pl.BlockSpec((1, t_pad), lambda i: (0, 0)),     # resident bias
            ],
            out_specs=pl.BlockSpec((b_tile, t_pad), lambda i: (i, 0)),  # lane-dense output
        ),
        compiler_params=pltpu.CompilerParams(
            dimension_semantics=("parallel",),   # batch tiles shard across v7x's 2 TCs
            vmem_limit_bytes=vmem_limit,
        ),
        cost_estimate=cost,
    )(x2d, w_fused, b_pad)

    # Drop topic padding. (.squeeze(-1) in torch is a no-op for topic_num > 1.)
    # TODO(synk): for topic_num == 1 the PyTorch squeeze(-1)+softmax(dim=1) path is degenerate
    # (it errors / softmaxes over batch); this kernel keeps per-document (B, 1) semantics.
    return out_padded[:, :topic_num]


# --------------------------------------------------------------------------- demo / check
if __name__ == "__main__":
    # Small shapes implied by the forward: batch=2, n_sents=8, d_model=32, topic_num=16
    B, S, D, T = 2, 8, 32, 16

    key = jax.random.PRNGKey(0)
    kx, kw, kb = jax.random.split(key, 3)

    sents_vec = jax.random.normal(kx, (B, S, D), dtype=jnp.float32)

    # Deterministic parameter init mirroring nn.Linear shapes: weight (T, D), bias (T,)
    limit_w = math.sqrt(6.0 / (D + T))
    weight = jax.random.uniform(kw, (T, D), minval=-limit_w, maxval=limit_w, dtype=jnp.float32)
    limit_b = 1.0 / math.sqrt(D)
    bias = jax.random.uniform(kb, (T,), minval=-limit_b, maxval=limit_b, dtype=jnp.float32)

    # Reference in plain JAX (same math as the PyTorch module).
    doc = jnp.mean(sents_vec, axis=1)
    ref = jax.nn.softmax(doc @ weight.T + bias, axis=1)

    # ---- f32 path (matches PyTorch default dtype) ----
    w_fused, b_pad = prepare_params(weight, bias, S, x_dtype=jnp.float32)
    out = jax.block_until_ready(topic_predictor(sents_vec, w_fused, b_pad, T))
    assert out.shape == (B, T)
    assert jnp.allclose(out, ref, atol=2e-3, rtol=2e-3), float(jnp.max(jnp.abs(out - ref)))
    assert jnp.allclose(jnp.sum(out, axis=1), 1.0, atol=1e-3)

    # ---- bf16 streaming path (halves x HBM bytes, MXU bf16 fast path; f32 softmax) ----
    w_bf, b_pad_bf = prepare_params(weight, bias, S, x_dtype=jnp.bfloat16)
    out_bf = jax.block_until_ready(
        topic_predictor(sents_vec.astype(jnp.bfloat16), w_bf, b_pad_bf, T))
    assert out_bf.shape == (B, T)
    assert jnp.allclose(out_bf, ref, atol=3e-2, rtol=3e-2)
    assert jnp.allclose(jnp.sum(out_bf, axis=1), 1.0, atol=2e-2)

    print("KERNEL_OK")
</pallas_src>

<mosaic_0001>
module attributes {stable_mosaic.version = 11 : i64} {
  func.func @topic_predictor_kernel(%arg0: i32, %arg1: memref<2x256xf32, #tpu.memory_space<vmem>>, %arg2: memref<256x128xf32, #tpu.memory_space<vmem>>, %arg3: memref<1x128xf32, #tpu.memory_space<vmem>>, %arg4: memref<2x128xf32, #tpu.memory_space<vmem>>) attributes {dimension_semantics = [#tpu.dimension_semantics<parallel>], iteration_bounds = array<i64: 1>, scalar_prefetch = 0 : i64, scratch_operands = 0 : i64, tpu.core_type = #tpu.core_type<tc>, window_params = [{transform_indices = @transform_0, window_bounds = array<i64: 2, 256>}, {pipeline_mode = #tpu.pipeline_mode<synchronous>, transform_indices = @transform_1, window_bounds = array<i64: 256, 128>}, {pipeline_mode = #tpu.pipeline_mode<synchronous>, transform_indices = @transform_2, window_bounds = array<i64: 1, 128>}, {transform_indices = @transform_3, window_bounds = array<i64: 2, 128>}]} {
    %c0 = arith.constant 0 : index
    %c0_0 = arith.constant 0 : index
    %0 = vector.load %arg1[%c0, %c0_0] : memref<2x256xf32, #tpu.memory_space<vmem>>, vector<2x256xf32>
    %c0_1 = arith.constant 0 : index
    %c0_2 = arith.constant 0 : index
    %1 = vector.load %arg2[%c0_1, %c0_2] : memref<256x128xf32, #tpu.memory_space<vmem>>, vector<256x128xf32>
    %cst = arith.constant dense<0.000000e+00> : vector<2x128xf32>
    %2 = tpu.matmul %0, %1, %cst {dimension_numbers = #tpu.dot_dimension_numbers<[1], [0], [0], [1], [0, 0, 1, 1], [], []>} : vector<2x256xf32>, vector<256x128xf32>, vector<2x128xf32> -> vector<2x128xf32>
    %c0_3 = arith.constant 0 : index
    %c0_4 = arith.constant 0 : index
    %3 = vector.load %arg3[%c0_3, %c0_4] : memref<1x128xf32, #tpu.memory_space<vmem>>, vector<1x128xf32>
    %4 = vector.broadcast %3 : vector<1x128xf32> to vector<2x128xf32>
    %5 = arith.addf %2, %4 : vector<2x128xf32>
    %cst_5 = arith.constant dense<0xFF800000> : vector<2xf32>
    %6 = vector.multi_reduction <maximumf>, %5, %cst_5 [1] : vector<2x128xf32> to vector<2xf32>
    %7 = vector.shape_cast %6 : vector<2xf32> to vector<2x1xf32>
    %8 = vector.broadcast %7 : vector<2x1xf32> to vector<2x128xf32>
    %9 = arith.subf %5, %8 : vector<2x128xf32>
    %10 = math.exp %9 : vector<2x128xf32>
    %cst_6 = arith.constant dense<0.000000e+00> : vector<2xf32>
    %11 = vector.multi_reduction <add>, %10, %cst_6 [1] : vector<2x128xf32> to vector<2xf32>
    %12 = vector.shape_cast %11 : vector<2xf32> to vector<2x1xf32>
    %13 = tpu.reciprocal %12 : vector<2x1xf32> -> vector<2x1xf32>
    %14 = vector.broadcast %13 : vector<2x1xf32> to vector<2x128xf32>
    %15 = arith.mulf %10, %14 : vector<2x128xf32>
    %c0_7 = arith.constant 0 : index
    %c0_8 = arith.constant 0 : index
    %16 = vector.load %arg4[%c0_7, %c0_8] : memref<2x128xf32, #tpu.memory_space<vmem>>, vector<2x128xf32>
    tpu.vector_store %arg4[%c0_7, %c0_8], %15 {strides = array<i32>} : memref<2x128xf32, #tpu.memory_space<vmem>>, vector<2x128xf32>,
    return
  }
  func.func @transform_0(%arg0: i32) -> (i32, i32) {
    %c0_i32 = arith.constant 0 : i32
    %c0_i32_0 = arith.constant 0 : i32
    return %arg0, %c0_i32 : i32, i32
  }
  func.func @transform_1(%arg0: i32) -> (i32, i32) {
    %c0_i32 = arith.constant 0 : i32
    %c0_i32_0 = arith.constant 0 : i32
    %c0_i32_1 = arith.constant 0 : i32
    return %c0_i32, %c0_i32_0 : i32, i32
  }
  func.func @transform_2(%arg0: i32) -> (i32, i32) {
    %c0_i32 = arith.constant 0 : i32
    %c0_i32_0 = arith.constant 0 : i32
    %c0_i32_1 = arith.constant 0 : i32
    return %c0_i32, %c0_i32_0 : i32, i32
  }
  func.func @transform_3(%arg0: i32) -> (i32, i32) {
    %c0_i32 = arith.constant 0 : i32
    %c0_i32_0 = arith.constant 0 : i32
    return %arg0, %c0_i32 : i32, i32
  }
}

</mosaic_0001>

<llo_original>
// kernel: tpu_custom_call.1
$region0: #{tpu_custom_call.1}
  #allocation0 [shape = 'u32[]', space=smem, size = 0x4, offset = 0x4, fixed_abs, tag = 'smem constant byte address 0x4 - core index']
  #allocation1 [shape = 'u32[144,128]{1,0:T(1,128)}', space=vmem, size = 0x12000, scoped, tag = 'internal scratch']
  %s0 = inlined_call_operand.hbm [shape: f32[2,256], index: 0, kind: input, shape index: {}]
  %s1 = inlined_call_operand.hbm [shape: f32[256,128], index: 1, kind: input, shape index: {}]
  %s2 = inlined_call_operand.vmem [shape: f32[1,128], index: 2, kind: input, shape index: {}]
  %s3 = inlined_call_operand.hbm [shape: f32[2,128], index: 3, kind: output, shape index: {}]
  %s4 = sld [smem:[#allocation0]]
  $region30: #{tpu_custom_call.1} parent=0
    _
  %s6 = ssub.s32 1, %s4
  %s7 = scalar_select 0, %s6, %s4
  $region1: #{tpu_custom_call.1} parent=0
    #allocation2 [shape = 'u8[2048]{0}', space=vmem, size = 0x800, scoped, tag = 'input window, operand 0, single buffered']
    #allocation3 [shape = 's32[1]{0}', space=sflag, size = 0x4, scoped, tag = 'scoped memory for tpu_custom_call.1']
    #allocation4 [shape = 's32[1]{0}', space=sflag, size = 0x4, scoped, tag = 'scoped memory for tpu_custom_call.1']
    #allocation5 [shape = 'u8[131072]{0}', space=vmem, size = 0x20000, scoped, tag = 'input window, operand 1, single buffered']
    #allocation6 [shape = 's32[1]{0}', space=sflag, size = 0x4, scoped, tag = 'scoped memory for tpu_custom_call.1']
    #allocation7 [shape = 'u8[1024]{0}', space=vmem, size = 0x400, scoped, tag = 'output window, operand 0, single buffered']
    %8 = vsyncpa [#allocation3], 0
    %9 = vsyncpa [#allocation6], 0
    %10 = vsyncpa [#allocation4], 0
    // Predicated region
    $region2: #{tpu_custom_call.1} parent=1 // pred_check
      _
    $region3: #{tpu_custom_call.1} parent=1 // pred_check_branch
      %12 = sbr.rel (0) target = $region5
    $region4: #{tpu_custom_call.1} parent=1 // pred_region
      %s14 = ssub.s32 64, 64
      %15 = vsyncadd [#allocation3], %s14
      %s17 = sshll.u32 [#allocation2], 4
      %s18 = int_to_ptr.vmem [resolvable:$true] %s17
      %20 = dma.hbm_to_vmem [thread:$0]  %s0, 64, %s18, [#allocation3]
    $region5: #{tpu_custom_call.1} parent=1 // pred_fallthru
      _
    // Predicated region
    $region6: #{tpu_custom_call.1} parent=1 // pred_check
      _
    $region7: #{tpu_custom_call.1} parent=1 // pred_check_branch
      %22 = sbr.rel (0) target = $region9
    $region8: #{tpu_custom_call.1} parent=1 // pred_region
      %s24 = ssub.s32 4096, 4096
      %25 = vsyncadd [#allocation6], %s24
      %s26 = sshll.u32 [#allocation5], 4
      %s27 = int_to_ptr.vmem [resolvable:$true] %s26
      %32 = dma.hbm_to_vmem [thread:$0]  %s1, 4096, %s27, [#allocation6], 128, 128, 8
    $region9: #{tpu_custom_call.1} parent=1 // pred_fallthru
      _
    // Predicated region
    $region10: #{tpu_custom_call.1} parent=1 // pred_check
      _
    $region11: #{tpu_custom_call.1} parent=1 // pred_check_branch
      %34 = sbr.rel (0) target = $region13
    $region12: #{tpu_custom_call.1} parent=1 // pred_region
      _
    $region13: #{tpu_custom_call.1} parent=1 // pred_fallthru
      _
    // Predicated region
    $region14: #{tpu_custom_call.1} parent=1 // pred_check
      _
    $region15: #{tpu_custom_call.1} parent=1 // pred_check_branch
      %36 = sbr.rel (0) target = $region17
    $region16: #{tpu_custom_call.1} parent=1 // pred_region
      %37 = dma.done [#allocation3], 64
    $region17: #{tpu_custom_call.1} parent=1 // pred_fallthru
      _
    // Predicated region
    $region18: #{tpu_custom_call.1} parent=1 // pred_check
      _
    $region19: #{tpu_custom_call.1} parent=1 // pred_check_branch
      %39 = sbr.rel (0) target = $region21
    $region20: #{tpu_custom_call.1} parent=1 // pred_region
      %40 = dma.done [#allocation6], 4096
    $region21: #{tpu_custom_call.1} parent=1 // pred_fallthru
      _
    %v41 = vld [vmem:[#allocation2] sm:$0xf]
    %v42 = vld [vmem:[#allocation5] sm:$0xff]
    %v43 = vld [vmem:[#allocation5 + $0x8] sm:$0xff]
    %v44 = vld [vmem:[#allocation5 + $0x10] sm:$0xff]
    %v45 = vld [vmem:[#allocation5 + $0x18] sm:$0xff]
    %v46 = vld [vmem:[#allocation5 + $0x20] sm:$0xff]
    %v47 = vld [vmem:[#allocation5 + $0x28] sm:$0xff]
    %v48 = vld [vmem:[#allocation5 + $0x30] sm:$0xff]
    %v49 = vld [vmem:[#allocation5 + $0x38] sm:$0xff]
    %v50 = vld [vmem:[#allocation5 + $0x40] sm:$0xff]
    %v51 = vld [vmem:[#allocation5 + $0x48] sm:$0xff]
    %v52 = vld [vmem:[#allocation5 + $0x50] sm:$0xff]
    %v53 = vld [vmem:[#allocation5 + $0x58] sm:$0xff]
    %v54 = vld [vmem:[#allocation5 + $0x60] sm:$0xff]
    %v55 = vld [vmem:[#allocation5 + $0x68] sm:$0xff]
    %v56 = vld [vmem:[#allocation5 + $0x70] sm:$0xff]
    %v57 = vld [vmem:[#allocation5 + $0x78] sm:$0xff]
    %v58 = vld [vmem:[#allocation5 + $0x80] sm:$0xff]
    %v59 = vld [vmem:[#allocation5 + $0x88] sm:$0xff]
    %v60 = vld [vmem:[#allocation5 + $0x90] sm:$0xff]
    %v61 = vld [vmem:[#allocation5 + $0x98] sm:$0xff]
    %v62 = vld [vmem:[#allocation5 + $0xa0] sm:$0xff]
    %v63 = vld [vmem:[#allocation5 + $0xa8] sm:$0xff]
    %v64 = vld [vmem:[#allocation5 + $0xb0] sm:$0xff]
    %v65 = vld [vmem:[#allocation5 + $0xb8] sm:$0xff]
    %v66 = vld [vmem:[#allocation5 + $0xc0] sm:$0xff]
    %v67 = vld [vmem:[#allocation5 + $0xc8] sm:$0xff]
    %v68 = vld [vmem:[#allocation5 + $0xd0] sm:$0xff]
    %v69 = vld [vmem:[#allocation5 + $0xd8] sm:$0xff]
    %v70 = vld [vmem:[#allocation5 + $0xe0] sm:$0xff]
    %v71 = vld [vmem:[#allocation5 + $0xe8] sm:$0xff]
    %v72 = vld [vmem:[#allocation5 + $0xf0] sm:$0xff]
    %v73 = vld [vmem:[#allocation5 + $0xf8] sm:$0xff]
    %v74 = vld [vmem:[%s2] sm:$0x1]
    %v76 = vlaneseq
    %v77 = vshrl.u32 %v76, 7
    %v78 = vsub.s32 0, %v77
    %v79 = vrot.slane %v74, %v78
    %v83 = vunpack.c.l.s4 1983009808
    %v84 = vunpack.c.0.s8 %v83
    %v85 = vlaneseq
    %v86 = vshrl.u32 %v85, 7
    %v87 = vsub.s32 %v84, %v86
    %v88 = vrot.slane %v41, %v87
    %v89 = vcombine.high %v88, %v88
    %92 = vmatprep.subr.mxu0 0.0
    %93 = vmatpush1.msra.mxu0 %v42
    %94 = vmatprep.subr.mxu0 0.0
    %95 = vmatpush1.msra.mxu0 %v43
    %96 = vmatprep.subr.mxu0 0.0
    %97 = vmatpush1.msra.mxu0 %v44
    %98 = vmatprep.subr.mxu0 0.0
    %99 = vmatpush1.msra.mxu0 %v45
    %100 = vmatprep.subr.mxu0 0.0
    %101 = vmatpush1.msra.mxu0 %v46
    %102 = vmatprep.subr.mxu0 0.0
    %103 = vmatpush1.msra.mxu0 %v47
    %104 = vmatprep.subr.mxu0 0.0
    %105 = vmatpush1.msra.mxu0 %v48
    %106 = vmatprep.subr.mxu0 0.0
    %107 = vmatpush1.msra.mxu0 %v49
    %108 = vmatprep.subr.mxu0 0.0
    %109 = vmatpush1.msra.mxu0 %v50
    %110 = vmatprep.subr.mxu0 0.0
    %111 = vmatpush1.msra.mxu0 %v51
    %112 = vmatprep.subr.mxu0 0.0
    %113 = vmatpush1.msra.mxu0 %v52
    %114 = vmatprep.subr.mxu0 0.0
    %115 = vmatpush1.msra.mxu0 %v53
    %116 = vmatprep.subr.mxu0 0.0
    %117 = vmatpush1.msra.mxu0 %v54
    %118 = vmatprep.subr.mxu0 0.0
    %119 = vmatpush1.msra.mxu0 %v55
    %120 = vmatprep.subr.mxu0 0.0
    %121 = vmatpush1.msra.mxu0 %v56
    %122 = vmatprep.subr.mxu0 0.0
    %123 = vmatpush1.msra.mxu0 %v57
    %124 = vmatprep.subr.mxu0 0.0
    %125 = vmatpush1.msra.mxu0 %v58
    %126 = vmatprep.subr.mxu0 0.0
    %127 = vmatpush1.msra.mxu0 %v59
    %128 = vmatprep.subr.mxu0 0.0
    %129 = vmatpush1.msra.mxu0 %v60
    %130 = vmatprep.subr.mxu0 0.0
    %131 = vmatpush1.msra.mxu0 %v61
    %132 = vmatprep.subr.mxu0 0.0
    %133 = vmatpush1.msra.mxu0 %v62
    %134 = vmatprep.subr.mxu0 0.0
    %135 = vmatpush1.msra.mxu0 %v63
    %136 = vmatprep.subr.mxu0 0.0
    %137 = vmatpush1.msra.mxu0 %v64
    %138 = vmatprep.subr.mxu0 0.0
    %139 = vmatpush1.msra.mxu0 %v65
    %140 = vmatprep.subr.mxu0 0.0
    %141 = vmatpush1.msra.mxu0 %v66
    %142 = vmatprep.subr.mxu0 0.0
    %143 = vmatpush1.msra.mxu0 %v67
    %144 = vmatprep.subr.mxu0 0.0
    %145 = vmatpush1.msra.mxu0 %v68
    %146 = vmatprep.subr.mxu0 0.0
    %147 = vmatpush1.msra.mxu0 %v69
    %148 = vmatprep.subr.mxu0 0.0
    %149 = vmatpush1.msra.mxu0 %v70
    %150 = vmatprep.subr.mxu0 0.0
    %151 = vmatpush1.msra.mxu0 %v71
    %152 = vmatprep.subr.mxu0 0.0
    %153 = vmatpush1.msra.mxu0 %v72
    %154 = vmatprep.subr.mxu0 0.0
    %155 = vmatpush1.msra.mxu0 %v73
    %156 = vmatprep.mubr.f32.mxu0 %v89
    %157 = vmatmul.mubr.f32.gmra.mrb[0].mxu0 %v88
    %v158 = vpop.f32.mrb[0].mxu0
    %v159 = vadd.f32 %v79, %v158
    %v160 = vpop.f32.mrb[0].mxu0
    %161 = vdwg.mxu0
    %vm162 = vcmask 1041408
    %v163 = vsel %vm162, %v159, -inf
    %164 = vmax.xlane.f32.xlu0 %v163
    %v165 = vpop.xlane.xlu0 %164
    %v166 = vsub.f32 %v159, %v165
    %v167 = vmul.f32 %v166, 1.442695
    %v168 = vpow.pop %v167
    %v169 = vsel %vm162, %v168, 0.0
    %170 = vadd.xlane.f32.xlu0 %v169
    %v171 = vpop.xlane.xlu0 %170
    %v172 = vrcp.pop %v171
    %v173 = vmul.f32 %v168, %v172
    %174 = vst [vmem:[#allocation7] sm:$0x3] %v173
    // Predicated region
    $region22: #{tpu_custom_call.1} parent=1 // pred_check
      _
    $region23: #{tpu_custom_call.1} parent=1 // pred_check_branch
      %176 = sbr.rel (0) target = $region25
    $region24: #{tpu_custom_call.1} parent=1 // pred_region
      %s178 = ssub.s32 32, 32
      %179 = vsyncadd [#allocation4], %s178
      %s181 = sshll.u32 [#allocation7], 4
      %s182 = int_to_ptr.vmem [resolvable:$true] %s181
      %184 = dma.vmem_to_hbm [thread:$0]  %s182, 32, %s3, [#allocation4]
    $region25: #{tpu_custom_call.1} parent=1 // pred_fallthru
      _
    // Predicated region
    $region26: #{tpu_custom_call.1} parent=1 // pred_check
      _
    $region27: #{tpu_custom_call.1} parent=1 // pred_check_branch
      %186 = sbr.rel (0) target = $region29
    $region28: #{tpu_custom_call.1} parent=1 // pred_region
      %187 = dma.done [#allocation4], 32
    $region29: #{tpu_custom_call.1} parent=1 // pred_fallthru
      _
    %188 = vsyncpa [#allocation3], 1
    %189 = vsyncpa [#allocation6], 1
    %190 = vsyncpa [#allocation4], 1

</llo_original>
